<compile_context>
chip_gen: v7x
topology: tpu7x:2x2x1
jax: 0.10.0
libtpu: 0.0.40
codegen_flags: <defaults>
</compile_context>

<pallas_src>
import functools
import math

import numpy as np
import jax
import jax.numpy as jnp
from jax.experimental import pallas as pl
from jax.experimental.pallas import tpu as pltpu


def _time_encode_kernel(ts_ref, fp_ref, out_ref, *, dim, pack):
    # ts_ref : (TR, pack)       float32   -- pack time points per output row
    # fp_ref : (2, pack*dim)    float32   -- row 0 = tiled basis_freq, row 1 = tiled phase
    # out_ref: (TR, pack*dim)   out_dtype
    tr = ts_ref.shape[0]
    t = ts_ref[...]                                        # (TR, pack)

    # Lane-dense (TR, pack*dim) copy of the time points: point p broadcast
    # across its dim-wide lane group.  Broadcast + lane-concat (rope-style) is
    # cheap (XLU/VPU); it keeps the expensive cos polynomial and the fma below
    # running on full 128-lane vregs with a single unmasked full-width store.
    parts = [jnp.broadcast_to(t[:, p:p + 1], (tr, dim)) for p in range(pack)]
    t_wide = parts[0] if pack == 1 else jnp.concatenate(parts, axis=1)

    freq = fp_ref[0:1, :]                                  # (1, pack*dim)
    phase = fp_ref[1:2, :]                                 # (1, pack*dim)
    out_ref[...] = jnp.cos(t_wide * freq + phase).astype(out_ref.dtype)


def time_encode(ts, basis_freq, phase, *, tile_rows=8192, out_dtype=jnp.float32):
    """ts: [B] or [B, S]. Returns [B, dim] or [B, S, dim] in out_dtype (f32 default)."""
    orig_shape = ts.shape
    dim = int(basis_freq.shape[0])

    ts_flat = jnp.asarray(ts, jnp.float32).reshape(-1)     # [N]
    n = int(ts_flat.shape[0])
    if n == 0:
        return jnp.zeros((*orig_shape, dim), out_dtype)

    # Lane packing factor: pack time points side-by-side so each output row is
    # pack*dim lanes wide (ideally exactly 128).  gcd keeps pack a divisor of N
    # so there is never any padding or post-kernel slice copy.
    if dim <= 128 and 128 % dim == 0:
        pack = max(math.gcd(128 // dim, n), 1)
    else:
        pack = 1

    rows = n // pack
    width = pack * dim

    ts_packed = ts_flat.reshape(rows, pack)                # free reshape

    freq = jnp.asarray(basis_freq, jnp.float32).reshape(dim)
    ph = jnp.asarray(phase, jnp.float32).reshape(dim)
    fp = jnp.stack([jnp.tile(freq, pack), jnp.tile(ph, pack)], axis=0)  # (2, width)

    # Row tile: large (multi-MiB output block) but never larger than the array.
    # If it is not the full extent it must be a multiple of 8 (sublane rule);
    # a ragged final block is handled by Pallas masking.
    tr = min(tile_rows, rows)
    if tr != rows:
        tr = max((tr // 8) * 8, 8)
    grid = (pl.cdiv(rows, tr),)

    out = pl.pallas_call(
        functools.partial(_time_encode_kernel, dim=dim, pack=pack),
        out_shape=jax.ShapeDtypeStruct((rows, width), out_dtype),
        grid=grid,
        in_specs=[
            pl.BlockSpec((tr, pack), lambda i: (i, 0)),
            pl.BlockSpec((2, width), lambda i: (0, 0)),    # grid-invariant block
        ],
        out_specs=pl.BlockSpec((tr, width), lambda i: (i, 0)),
        compiler_params=pltpu.CompilerParams(
            dimension_semantics=("parallel",),
        ),
    )(ts_packed, fp)

    # (rows, pack*dim) -> [..., dim] is contiguous in time-point order: free.
    return out.reshape(*orig_shape, dim)


def make_time_encode_params(dim):
    """Deterministic init matching the PyTorch module __init__."""
    basis_freq = (1.0 / 10.0 ** np.linspace(0, 9, dim)).astype(np.float32)
    phase = np.zeros(dim, dtype=np.float32)
    return jnp.asarray(basis_freq), jnp.asarray(phase)


if __name__ == "__main__":
    dim = 32
    batch, seq = 2, 8

    basis_freq, phase = make_time_encode_params(dim)

    key = jax.random.PRNGKey(0)
    ts = jax.random.uniform(key, (batch, seq), jnp.float32) * 100.0

    harmonic = jax.block_until_ready(time_encode(ts, basis_freq, phase))
    ref = jnp.cos(ts[..., None] * basis_freq + phase)
    assert harmonic.shape == (batch, seq, dim), harmonic.shape
    np.testing.assert_allclose(np.asarray(harmonic), np.asarray(ref),
                               rtol=1e-5, atol=1e-5)

    # 1-D ts path (small N -> reduced packing, single-row block).
    ts1d = jax.random.uniform(jax.random.PRNGKey(1), (batch,), jnp.float32)
    h1d = jax.block_until_ready(time_encode(ts1d, basis_freq, phase))
    ref1d = jnp.cos(ts1d[..., None] * basis_freq + phase)
    assert h1d.shape == (batch, dim), h1d.shape
    np.testing.assert_allclose(np.asarray(h1d), np.asarray(ref1d),
                               rtol=1e-5, atol=1e-5)

    # Larger case to exercise the multi-step tiled grid (rows > tile_rows).
    ts_big = jax.random.uniform(jax.random.PRNGKey(2), (16, 4096), jnp.float32) * 100.0
    h_big = jax.block_until_ready(time_encode(ts_big, basis_freq, phase))
    ref_big = jnp.cos(ts_big[..., None] * basis_freq + phase)
    assert h_big.shape == (16, 4096, dim), h_big.shape
    np.testing.assert_allclose(np.asarray(h_big), np.asarray(ref_big),
                               rtol=1e-5, atol=1e-5)

    # TODO(synk): for raw epoch-scale timestamps, subtract a reference time
    # before casting to float32 (float32 ulp at 1e9 >> 2*pi), matching-but-
    # improving the PyTorch float32 behavior.

    print("KERNEL_OK")
</pallas_src>

<mosaic_0001>
module attributes {stable_mosaic.version = 11 : i64} {
  func.func @_time_encode_kernel(%arg0: i32, %arg1: memref<4x4xf32, #tpu.memory_space<vmem>>, %arg2: memref<2x128xf32, #tpu.memory_space<vmem>>, %arg3: memref<4x128xf32, #tpu.memory_space<vmem>>) attributes {dimension_semantics = [#tpu.dimension_semantics<parallel>], iteration_bounds = array<i64: 1>, scalar_prefetch = 0 : i64, scratch_operands = 0 : i64, tpu.core_type = #tpu.core_type<tc>, window_params = [{transform_indices = @transform_0, window_bounds = array<i64: 4, 4>}, {pipeline_mode = #tpu.pipeline_mode<synchronous>, transform_indices = @transform_1, window_bounds = array<i64: 2, 128>}, {transform_indices = @transform_2, window_bounds = array<i64: 4, 128>}]} {
    %c0 = arith.constant 0 : index
    %c0_0 = arith.constant 0 : index
    %0 = vector.load %arg1[%c0, %c0_0] : memref<4x4xf32, #tpu.memory_space<vmem>>, vector<4x4xf32>
    %1 = vector.extract_strided_slice %0 {offsets = [0, 0], sizes = [4, 1], strides = [1, 1]} : vector<4x4xf32> to vector<4x1xf32>
    %2 = vector.shape_cast %1 : vector<4x1xf32> to vector<4x1xf32>
    %3 = vector.broadcast %2 : vector<4x1xf32> to vector<4x32xf32>
    %4 = vector.extract_strided_slice %0 {offsets = [0, 1], sizes = [4, 1], strides = [1, 1]} : vector<4x4xf32> to vector<4x1xf32>
    %5 = vector.shape_cast %4 : vector<4x1xf32> to vector<4x1xf32>
    %6 = vector.broadcast %5 : vector<4x1xf32> to vector<4x32xf32>
    %7 = vector.extract_strided_slice %0 {offsets = [0, 2], sizes = [4, 1], strides = [1, 1]} : vector<4x4xf32> to vector<4x1xf32>
    %8 = vector.shape_cast %7 : vector<4x1xf32> to vector<4x1xf32>
    %9 = vector.broadcast %8 : vector<4x1xf32> to vector<4x32xf32>
    %10 = vector.extract_strided_slice %0 {offsets = [0, 3], sizes = [4, 1], strides = [1, 1]} : vector<4x4xf32> to vector<4x1xf32>
    %11 = vector.shape_cast %10 : vector<4x1xf32> to vector<4x1xf32>
    %12 = vector.broadcast %11 : vector<4x1xf32> to vector<4x32xf32>
    %13 = tpu.concatenate %3, %6, %9, %12 in 1 : vector<4x32xf32>, vector<4x32xf32>, vector<4x32xf32>, vector<4x32xf32> -> vector<4x128xf32>
    %c0_1 = arith.constant 0 : index
    %c0_2 = arith.constant 0 : index
    %14 = vector.load %arg2[%c0_1, %c0_2] : memref<2x128xf32, #tpu.memory_space<vmem>>, vector<1x128xf32>
    %c1 = arith.constant 1 : index
    %c0_3 = arith.constant 0 : index
    %15 = vector.load %arg2[%c1, %c0_3] : memref<2x128xf32, #tpu.memory_space<vmem>>, vector<1x128xf32>
    %16 = vector.broadcast %14 : vector<1x128xf32> to vector<4x128xf32>
    %17 = arith.mulf %13, %16 : vector<4x128xf32>
    %18 = vector.broadcast %15 : vector<1x128xf32> to vector<4x128xf32>
    %19 = arith.addf %17, %18 : vector<4x128xf32>
    %20 = math.cos %19 : vector<4x128xf32>
    %c0_4 = arith.constant 0 : index
    %c0_5 = arith.constant 0 : index
    %21 = vector.load %arg3[%c0_4, %c0_5] : memref<4x128xf32, #tpu.memory_space<vmem>>, vector<4x128xf32>
    tpu.vector_store %arg3[%c0_4, %c0_5], %20 {strides = array<i32>} : memref<4x128xf32, #tpu.memory_space<vmem>>, vector<4x128xf32>,
    return
  }
  func.func @transform_0(%arg0: i32) -> (i32, i32) {
    %c0_i32 = arith.constant 0 : i32
    %c0_i32_0 = arith.constant 0 : i32
    return %arg0, %c0_i32 : i32, i32
  }
  func.func @transform_1(%arg0: i32) -> (i32, i32) {
    %c0_i32 = arith.constant 0 : i32
    %c0_i32_0 = arith.constant 0 : i32
    %c0_i32_1 = arith.constant 0 : i32
    return %c0_i32, %c0_i32_0 : i32, i32
  }
  func.func @transform_2(%arg0: i32) -> (i32, i32) {
    %c0_i32 = arith.constant 0 : i32
    %c0_i32_0 = arith.constant 0 : i32
    return %arg0, %c0_i32 : i32, i32
  }
}

</mosaic_0001>

<llo_original>
// kernel: tpu_custom_call.1
$region0: #{tpu_custom_call.1}
  #allocation0 [shape = 'u32[]', space=smem, size = 0x4, offset = 0x4, fixed_abs, tag = 'smem constant byte address 0x4 - core index']
  #allocation1 [shape = 'u32[144,128]{1,0:T(1,128)}', space=vmem, size = 0x12000, scoped, tag = 'internal scratch']
  %s0 = inlined_call_operand.hbm [shape: f32[4,4], index: 0, kind: input, shape index: {}]
  %s1 = inlined_call_operand.vmem [shape: f32[2,128], index: 1, kind: input, shape index: {}]
  %s2 = inlined_call_operand.hbm [shape: f32[4,128], index: 2, kind: output, shape index: {}]
  %s3 = sld [smem:[#allocation0]]
  $region22: #{tpu_custom_call.1} parent=0
    _
  %s5 = ssub.s32 1, %s3
  %s6 = scalar_select 0, %s5, %s3
  $region1: #{tpu_custom_call.1} parent=0
    #allocation2 [shape = 'u8[2048]{0}', space=vmem, size = 0x800, scoped, tag = 'input window, operand 0, single buffered']
    #allocation3 [shape = 's32[1]{0}', space=sflag, size = 0x4, scoped, tag = 'scoped memory for tpu_custom_call.1']
    #allocation4 [shape = 's32[1]{0}', space=sflag, size = 0x4, scoped, tag = 'scoped memory for tpu_custom_call.1']
    #allocation5 [shape = 'u8[2048]{0}', space=vmem, size = 0x800, scoped, tag = 'output window, operand 0, single buffered']
    %7 = vsyncpa [#allocation3], 0
    %8 = vsyncpa [#allocation4], 0
    // Predicated region
    $region2: #{tpu_custom_call.1} parent=1 // pred_check
      _
    $region3: #{tpu_custom_call.1} parent=1 // pred_check_branch
      %10 = sbr.rel (0) target = $region5
    $region4: #{tpu_custom_call.1} parent=1 // pred_region
      %s12 = ssub.s32 64, 64
      %13 = vsyncadd [#allocation3], %s12
      %s15 = sshll.u32 [#allocation2], 4
      %s16 = int_to_ptr.vmem [resolvable:$true] %s15
      %18 = dma.hbm_to_vmem [thread:$0]  %s0, 64, %s16, [#allocation3]
    $region5: #{tpu_custom_call.1} parent=1 // pred_fallthru
      _
    // Predicated region
    $region6: #{tpu_custom_call.1} parent=1 // pred_check
      _
    $region7: #{tpu_custom_call.1} parent=1 // pred_check_branch
      %20 = sbr.rel (0) target = $region9
    $region8: #{tpu_custom_call.1} parent=1 // pred_region
      _
    $region9: #{tpu_custom_call.1} parent=1 // pred_fallthru
      _
    // Predicated region
    $region10: #{tpu_custom_call.1} parent=1 // pred_check
      _
    $region11: #{tpu_custom_call.1} parent=1 // pred_check_branch
      %22 = sbr.rel (0) target = $region13
    $region12: #{tpu_custom_call.1} parent=1 // pred_region
      %23 = dma.done [#allocation3], 64
    $region13: #{tpu_custom_call.1} parent=1 // pred_fallthru
      _
    %v24 = vld [vmem:[#allocation2] sm:$0xf]
    %26 = vset.pattern.permute.xlu0 0
    %27 = vperm.xlu0 %26, %v24
    %v28 = vpop.permute.xlu0 %27
    %30 = vset.pattern.permute.xlu0 1
    %31 = vperm.xlu0 %30, %v24
    %v32 = vpop.permute.xlu0 %31
    %34 = vset.pattern.permute.xlu0 2
    %35 = vperm.xlu0 %34, %v24
    %v36 = vpop.permute.xlu0 %35
    %38 = vset.pattern.permute.xlu0 3
    %39 = vperm.xlu0 %38, %v24
    %v40 = vpop.permute.xlu0 %39
    %vm42 = vcmask 261120
    %v43 = vsel %vm42, %v28, %v32
    %vm44 = vcmask 523264
    %v45 = vsel %vm44, %v43, %v36
    %vm46 = vcmask 785408
    %v47 = vsel %vm46, %v45, %v40
    %v48 = vld [vmem:[%s1] sm:$0x1]
    %v49 = vld [vmem:[%s1 + $0x1] sm:$0x1]
    %v50 = vlaneseq
    %v51 = vshrl.u32 %v50, 7
    %v52 = vsub.s32 0, %v51
    %v53 = vrot.slane %v48, %v52
    %v54 = vmul.f32 %v47, %v53
    %v55 = vlaneseq
    %v56 = vshrl.u32 %v55, 7
    %v57 = vsub.s32 0, %v56
    %v58 = vrot.slane %v49, %v57
    %v59 = vadd.f32 %v54, %v58
    %v60 = vand.u32 2147483647, %v59
    %vm61 = vcmp.le.f32.partialorder %v60, 0.7853982
    %vm62 = vcmp.lt.s32.totalorder %v59, 0
    %v63 = vand.u32 %v59, 2139095040
    %v64 = vshrl.u32 %v63, 23
    %v65 = vsub.s32 %v64, 127
    %v66 = vand.u32 2147483647, %v59
    %v67 = vand.u32 %v66, 8388607
    %v68 = vor.u32 %v67, 8388608
    %v69 = vsub.s32 0, %v68
    %v70 = vadd.s32 %v65, 1
    %vm71 = vcmp.gt.s32.totalorder %v70, 0
    %v72 = vsel %vm71, %v70, 0
    %v73 = vshrl.u32 %v72, 5
    %v74 = vand.u32 %v72, 31
    %v75 = vsub.s32 32, %v74
    %v76 = vshrl.u32 683565275, %v75
    %v77 = vshll.u32 683565275, %v74
    %v78 = vshrl.u32 2475754826, %v75
    %v79 = vor.u32 %v77, %v78
    %v80 = vshll.u32 2475754826, %v74
    %v81 = vshrl.u32 2131351028, %v75
    %v82 = vor.u32 %v80, %v81
    %v83 = vshll.u32 2131351028, %v74
    %v84 = vshrl.u32 2102212464, %v75
    %v85 = vor.u32 %v83, %v84
    %v86 = vshll.u32 2102212464, %v74
    %v87 = vshrl.u32 920167782, %v75
    %v88 = vor.u32 %v86, %v87
    %v89 = vshll.u32 920167782, %v74
    %v90 = vshrl.u32 1326507024, %v75
    %v91 = vor.u32 %v89, %v90
    %vm92 = vcmp.lt.s32.totalorder %v73, 1
    %vm93 = vcmp.lt.s32.totalorder %v73, 2
    %vm94 = vcmp.lt.s32.totalorder %v73, 3
    %vm95 = vcmp.lt.s32.totalorder %v73, 4
    %v96 = vsel %vm92, %v76, %v79
    %v97 = vsel %vm95, %v85, 2102212464
    %v98 = vsel %vm94, %v82, %v97
    %v99 = vsel %vm93, %v96, %v98
    %v100 = vsel %vm92, %v79, %v82
    %v101 = vsel %vm95, %v88, 920167782
    %v102 = vsel %vm94, %v85, %v101
    %v103 = vsel %vm93, %v100, %v102
    %v104 = vsel %vm92, %v82, %v85
    %v105 = vsel %vm95, %v91, 1326507024
    %v106 = vsel %vm94, %v88, %v105
    %v107 = vsel %vm93, %v104, %v106
    %v108 = vshll.u32 %v68, 8
    %v109 = vmul.u32.u64.compose %v108, %v107
    %v110 = vextract.low.u32 %v109
    %v111 = vextract.high.u32 %v109
    %v112 = vmul.u32.u64.compose %v108, %v103
    %v113 = vextract.low.u32 %v112
    %v114 = vextract.high.u32 %v112
    %v115 = vmul.u32 %v108, %v99
    %v116 = vadd.s32 %v111, %v113
    %vm117 = vc.u32 %v111, %v113
    %v118 = vadd.s32 %v114, 1
    %v119 = vsel %vm117, %v118, %v114
    %v120 = vadd.s32 %v115, %v119
    %v121 = vadd.s32 %v120, 536870912
    %v122 = vshrl.u32 %v121, 30
    %v123 = vshll.u32 %v122, 30
    %v124 = vsub.s32 %v120, %v123
    %vm125 = vcmp.lt.s32.totalorder %v124, 0
    %v126 = vsub.s32 0, %v124
    %v127 = vsel %vm125, %v126, %v124
    %v128 = vclz %v127
    %v129 = vsub.s32 %v128, 2
    %vm130 = vcmp.gt.s32.totalorder 0, %v129
    %v131 = vsel %vm130, 0, %v129
    %v132 = vsub.s32 32, %v131
    %v133 = vshll.u32 %v124, %v131
    %v134 = vshrl.u32 %v116, %v132
    %v135 = vor.u32 %v133, %v134
    %v136 = vsub.s32 4294967266, %v131
    %v137 = vadd.s32 %v136, 127
    %v138 = vshll.u32 %v137, 23
    %v139 = vor.u32 4788187, %v138
    %v140 = vand.u32 2147483647, %v139
    %v142 = vcvt.s32.f32 %v135
    %v143 = vmul.f32 %v142, %v140
    %v144 = vxor.u32 %v143, 2147483648
    %v145 = vsel %vm62, %v144, %v143
    %v146 = vsub.s32 4, %v122
    %v147 = vsel %vm62, %v146, %v122
    %v148 = vsel %vm61, %v59, %v145
    %v149 = vsel %vm61, 0, %v147
    %v150 = vcosq.f32.pop %v148
    %v151 = vsinq.f32.pop %v148
    %vm152 = vweird.f32 %v59
    %v153 = vand.u32 %v149, 3
    %vm154 = vcmp.lt.s32.totalorder %v153, 2
    %vm155 = vcmp.eq.s32.totalorder %v153, 0
    %v156 = vxor.u32 %v151, 2147483648
    %v157 = vsel %vm155, %v150, %v156
    %vm158 = vcmp.eq.s32.totalorder %v153, 2
    %v159 = vxor.u32 %v150, 2147483648
    %v160 = vsel %vm158, %v159, %v151
    %v161 = vsel %vm154, %v157, %v160
    %v162 = vsel %vm152, nan, %v161
    %163 = vst [vmem:[#allocation5] sm:$0xf] %v162
    // Predicated region
    $region14: #{tpu_custom_call.1} parent=1 // pred_check
      _
    $region15: #{tpu_custom_call.1} parent=1 // pred_check_branch
      %165 = sbr.rel (0) target = $region17
    $region16: #{tpu_custom_call.1} parent=1 // pred_region
      %s167 = ssub.s32 64, 64
      %168 = vsyncadd [#allocation4], %s167
      %s170 = sshll.u32 [#allocation5], 4
      %s171 = int_to_ptr.vmem [resolvable:$true] %s170
      %173 = dma.vmem_to_hbm [thread:$0]  %s171, 64, %s2, [#allocation4]
    $region17: #{tpu_custom_call.1} parent=1 // pred_fallthru
      _
    // Predicated region
    $region18: #{tpu_custom_call.1} parent=1 // pred_check
      _
    $region19: #{tpu_custom_call.1} parent=1 // pred_check_branch
      %175 = sbr.rel (0) target = $region21
    $region20: #{tpu_custom_call.1} parent=1 // pred_region
      %176 = dma.done [#allocation4], 64
    $region21: #{tpu_custom_call.1} parent=1 // pred_fallthru
      _
    %177 = vsyncpa [#allocation3], 1
    %178 = vsyncpa [#allocation4], 1

</llo_original>
